<compile_context>
chip_gen: v7x
topology: tpu7x:2x2x1
jax: 0.10.0
libtpu: 0.0.40
codegen_flags: <defaults>
</compile_context>

<pallas_src>
import jax
import jax.numpy as jnp
from jax.experimental import pallas as pl
from jax.experimental.pallas import tpu as pltpu


def mlp_kernel(xT_ref, w1T_ref, b1_ref, w2T_ref, b2_ref, w3T_ref, b3_ref, o_ref):
    xT = xT_ref[...]                                                   # (D, TN)

    # Linear(input_dim, 64) + LeakyReLU(0.2)   -> (64, TN)
    h1 = jnp.dot(w1T_ref[...], xT, preferred_element_type=jnp.float32) + b1_ref[...]
    h1 = jnp.where(h1 > 0, h1, 0.2 * h1)

    # BatchNorm folded into Linear2 (wrapper); Dropouts are identity in eval.
    # Linear(64, 16) + LeakyReLU(0.2)          -> (16, TN)
    h2 = jnp.dot(w2T_ref[...], h1, preferred_element_type=jnp.float32) + b2_ref[...]
    h2 = jnp.where(h2 > 0, h2, 0.2 * h2)

    # Linear(16, 1)                            -> (1, TN), lane-dense store
    o_ref[...] = jnp.dot(w3T_ref[...], h2, preferred_element_type=jnp.float32) + b3_ref[...]


def my_model_forward(x, params, *, tile_n=4096):
    """x: (N, input_dim) float32. Returns (N,) float32 (the squeeze(1))."""
    (w1, b1, gamma, beta, run_mean, run_var, w2, b2, w3, b3) = params
    eps = 1e-5
    n, d = x.shape

    # ---- wrapper-side glue (layout + exact eval-mode BN fold) ----
    bn_scale = gamma / jnp.sqrt(run_var + eps)                         # (64,)
    bn_shift = beta - run_mean * bn_scale                              # (64,)

    w1T = w1.T                                                         # (64, D)
    w2T = w2.T * bn_scale[None, :]                                     # (16, 64) BN-folded
    b2f = b2 + w2.T @ bn_shift                                         # (16,)    BN-folded
    w3T = w3.T                                                         # (1, 16)

    b1c = b1.reshape(64, 1)
    b2c = b2f.reshape(16, 1)
    b3c = b3.reshape(1, 1)

    # Batch tiling on the lane axis: tile multiple of 128, pad N up to grid multiple.
    tn = min(int(tile_n), pl.cdiv(n, 128) * 128)
    n_pad = pl.cdiv(n, tn) * tn

    xT = x.T                                                           # (D, N)
    if n_pad != n:
        xT = jnp.pad(xT, ((0, 0), (0, n_pad - n)))

    grid = (n_pad // tn,)

    flops = 2 * n * (d * 64 + 64 * 16 + 16 * 1)
    bytes_accessed = 4 * (n * d + n + w1.size + w2.size + w3.size + 64 + 16 + 1)

    out2d = pl.pallas_call(
        mlp_kernel,
        out_shape=jax.ShapeDtypeStruct((1, n_pad), jnp.float32),
        grid=grid,
        in_specs=[
            pl.BlockSpec((d, tn), lambda i: (0, i)),      # x^T tiles stream through
            pl.BlockSpec((64, d), lambda i: (0, 0)),      # weights: VMEM-resident
            pl.BlockSpec((64, 1), lambda i: (0, 0)),
            pl.BlockSpec((16, 64), lambda i: (0, 0)),
            pl.BlockSpec((16, 1), lambda i: (0, 0)),
            pl.BlockSpec((1, 16), lambda i: (0, 0)),
            pl.BlockSpec((1, 1), lambda i: (0, 0)),
        ],
        out_specs=pl.BlockSpec((1, tn), lambda i: (0, i)),
        compiler_params=pltpu.CompilerParams(
            dimension_semantics=("parallel",),
            vmem_limit_bytes=32 * 1024 * 1024,
        ),
        cost_estimate=pl.CostEstimate(
            flops=flops, transcendentals=0, bytes_accessed=bytes_accessed),
    )(xT, w1T, b1c, w2T, b2c, w3T, b3c)

    out = out2d.reshape(-1)                                            # (n_pad,)
    return out if n_pad == n else out[:n]


def reference_forward(x, params):
    """Pure-JAX eval-mode reference (mirrors the PyTorch module)."""
    (w1, b1, gamma, beta, run_mean, run_var, w2, b2, w3, b3) = params
    eps = 1e-5
    h = x @ w1 + b1
    h = jnp.where(h > 0, h, 0.2 * h)
    h = (h - run_mean) / jnp.sqrt(run_var + eps) * gamma + beta        # BN eval
    h = h @ w2 + b2                                                    # dropout = id
    h = jnp.where(h > 0, h, 0.2 * h)
    h = h @ w3 + b3
    return h[:, 0]


def init_params(key, input_dim):
    """Deterministic parameter init (PyTorch-Linear-style uniform bounds)."""
    ks = jax.random.split(key, 6)

    def linear_init(kw, kb, fan_in, fan_out):
        bound = 1.0 / jnp.sqrt(fan_in)
        w = jax.random.uniform(kw, (fan_in, fan_out), jnp.float32, -bound, bound)
        b = jax.random.uniform(kb, (fan_out,), jnp.float32, -bound, bound)
        return w, b

    w1, b1 = linear_init(ks[0], ks[1], input_dim, 64)
    w2, b2 = linear_init(ks[2], ks[3], 64, 16)
    w3, b3 = linear_init(ks[4], ks[5], 16, 1)

    # BatchNorm1d(64) defaults: gamma=1, beta=0, running_mean=0, running_var=1
    gamma = jnp.ones((64,), jnp.float32)
    beta = jnp.zeros((64,), jnp.float32)
    run_mean = jnp.zeros((64,), jnp.float32)
    run_var = jnp.ones((64,), jnp.float32)

    return (w1, b1, gamma, beta, run_mean, run_var, w2, b2, w3, b3)


if __name__ == "__main__":
    key = jax.random.PRNGKey(0)
    k_x, k_p = jax.random.split(key)

    input_dim = 32
    batch = 8
    x = jax.random.normal(k_x, (batch, input_dim), jnp.float32)
    params = init_params(k_p, input_dim)

    y = my_model_forward(x, params)
    jax.block_until_ready(y)

    assert y.shape == (batch,) and y.dtype == jnp.float32
    y_ref = reference_forward(x, params)
    assert jnp.allclose(y, y_ref, atol=1e-4, rtol=1e-4), "mismatch vs reference"
    print("KERNEL_OK")
</pallas_src>

<mosaic_0001>
module attributes {stable_mosaic.version = 11 : i64} {
  func.func @mlp_kernel(%arg0: i32, %arg1: memref<32x128xf32, #tpu.memory_space<vmem>>, %arg2: memref<64x32xf32, #tpu.memory_space<vmem>>, %arg3: memref<64x1xf32, #tpu.memory_space<vmem>>, %arg4: memref<16x64xf32, #tpu.memory_space<vmem>>, %arg5: memref<16x1xf32, #tpu.memory_space<vmem>>, %arg6: memref<1x16xf32, #tpu.memory_space<vmem>>, %arg7: memref<1x1xf32, #tpu.memory_space<vmem>>, %arg8: memref<1x128xf32, #tpu.memory_space<vmem>>) attributes {dimension_semantics = [#tpu.dimension_semantics<parallel>], iteration_bounds = array<i64: 1>, scalar_prefetch = 0 : i64, scratch_operands = 0 : i64, tpu.core_type = #tpu.core_type<tc>, window_params = [{transform_indices = @transform_0, window_bounds = array<i64: 32, 128>}, {pipeline_mode = #tpu.pipeline_mode<synchronous>, transform_indices = @transform_1, window_bounds = array<i64: 64, 32>}, {pipeline_mode = #tpu.pipeline_mode<synchronous>, transform_indices = @transform_2, window_bounds = array<i64: 64, 1>}, {pipeline_mode = #tpu.pipeline_mode<synchronous>, transform_indices = @transform_3, window_bounds = array<i64: 16, 64>}, {pipeline_mode = #tpu.pipeline_mode<synchronous>, transform_indices = @transform_4, window_bounds = array<i64: 16, 1>}, {pipeline_mode = #tpu.pipeline_mode<synchronous>, transform_indices = @transform_5, window_bounds = array<i64: 1, 16>}, {pipeline_mode = #tpu.pipeline_mode<synchronous>, transform_indices = @transform_6, window_bounds = array<i64: 1, 1>}, {transform_indices = @transform_7, window_bounds = array<i64: 1, 128>}]} {
    %c0 = arith.constant 0 : index
    %c0_0 = arith.constant 0 : index
    %0 = vector.load %arg1[%c0, %c0_0] : memref<32x128xf32, #tpu.memory_space<vmem>>, vector<32x128xf32>
    %c0_1 = arith.constant 0 : index
    %c0_2 = arith.constant 0 : index
    %1 = vector.load %arg2[%c0_1, %c0_2] : memref<64x32xf32, #tpu.memory_space<vmem>>, vector<64x32xf32>
    %cst = arith.constant dense<0.000000e+00> : vector<64x128xf32>
    %2 = tpu.matmul %1, %0, %cst {dimension_numbers = #tpu.dot_dimension_numbers<[1], [0], [0], [1], [0, 0, 1, 1], [], []>} : vector<64x32xf32>, vector<32x128xf32>, vector<64x128xf32> -> vector<64x128xf32>
    %c0_3 = arith.constant 0 : index
    %c0_4 = arith.constant 0 : index
    %3 = vector.load %arg3[%c0_3, %c0_4] : memref<64x1xf32, #tpu.memory_space<vmem>>, vector<64x1xf32>
    %4 = vector.broadcast %3 : vector<64x1xf32> to vector<64x128xf32>
    %5 = arith.addf %2, %4 : vector<64x128xf32>
    %cst_5 = arith.constant 0.000000e+00 : f32
    %6 = vector.broadcast %cst_5 : f32 to vector<64x128xf32>
    %7 = arith.cmpf ogt, %5, %6 : vector<64x128xf32>
    %cst_6 = arith.constant 2.000000e-01 : f32
    %8 = vector.broadcast %cst_6 : f32 to vector<64x128xf32>
    %9 = arith.mulf %8, %5 : vector<64x128xf32>
    %10 = arith.select %7, %5, %9 : vector<64x128xi1>, vector<64x128xf32>
    %c0_7 = arith.constant 0 : index
    %c0_8 = arith.constant 0 : index
    %11 = vector.load %arg4[%c0_7, %c0_8] : memref<16x64xf32, #tpu.memory_space<vmem>>, vector<16x64xf32>
    %cst_9 = arith.constant dense<0.000000e+00> : vector<16x128xf32>
    %12 = tpu.matmul %11, %10, %cst_9 {dimension_numbers = #tpu.dot_dimension_numbers<[1], [0], [0], [1], [0, 0, 1, 1], [], []>} : vector<16x64xf32>, vector<64x128xf32>, vector<16x128xf32> -> vector<16x128xf32>
    %c0_10 = arith.constant 0 : index
    %c0_11 = arith.constant 0 : index
    %13 = vector.load %arg5[%c0_10, %c0_11] : memref<16x1xf32, #tpu.memory_space<vmem>>, vector<16x1xf32>
    %14 = vector.broadcast %13 : vector<16x1xf32> to vector<16x128xf32>
    %15 = arith.addf %12, %14 : vector<16x128xf32>
    %cst_12 = arith.constant 0.000000e+00 : f32
    %16 = vector.broadcast %cst_12 : f32 to vector<16x128xf32>
    %17 = arith.cmpf ogt, %15, %16 : vector<16x128xf32>
    %cst_13 = arith.constant 2.000000e-01 : f32
    %18 = vector.broadcast %cst_13 : f32 to vector<16x128xf32>
    %19 = arith.mulf %18, %15 : vector<16x128xf32>
    %20 = arith.select %17, %15, %19 : vector<16x128xi1>, vector<16x128xf32>
    %c0_14 = arith.constant 0 : index
    %c0_15 = arith.constant 0 : index
    %21 = vector.load %arg6[%c0_14, %c0_15] : memref<1x16xf32, #tpu.memory_space<vmem>>, vector<1x16xf32>
    %cst_16 = arith.constant dense<0.000000e+00> : vector<1x128xf32>
    %22 = tpu.matmul %21, %20, %cst_16 {dimension_numbers = #tpu.dot_dimension_numbers<[1], [0], [0], [1], [0, 0, 1, 1], [], []>} : vector<1x16xf32>, vector<16x128xf32>, vector<1x128xf32> -> vector<1x128xf32>
    %c0_17 = arith.constant 0 : index
    %c0_18 = arith.constant 0 : index
    %23 = vector.load %arg7[%c0_17, %c0_18] : memref<1x1xf32, #tpu.memory_space<vmem>>, vector<1x1xf32>
    %24 = vector.broadcast %23 : vector<1x1xf32> to vector<1x128xf32>
    %25 = arith.addf %22, %24 : vector<1x128xf32>
    %c0_19 = arith.constant 0 : index
    %c0_20 = arith.constant 0 : index
    %26 = vector.load %arg8[%c0_19, %c0_20] : memref<1x128xf32, #tpu.memory_space<vmem>>, vector<1x128xf32>
    tpu.vector_store %arg8[%c0_19, %c0_20], %25 {strides = array<i32>} : memref<1x128xf32, #tpu.memory_space<vmem>>, vector<1x128xf32>,
    return
  }
  func.func @transform_0(%arg0: i32) -> (i32, i32) {
    %c0_i32 = arith.constant 0 : i32
    %c0_i32_0 = arith.constant 0 : i32
    return %c0_i32, %arg0 : i32, i32
  }
  func.func @transform_1(%arg0: i32) -> (i32, i32) {
    %c0_i32 = arith.constant 0 : i32
    %c0_i32_0 = arith.constant 0 : i32
    %c0_i32_1 = arith.constant 0 : i32
    return %c0_i32, %c0_i32_0 : i32, i32
  }
  func.func @transform_2(%arg0: i32) -> (i32, i32) {
    %c0_i32 = arith.constant 0 : i32
    %c0_i32_0 = arith.constant 0 : i32
    %c0_i32_1 = arith.constant 0 : i32
    return %c0_i32, %c0_i32_0 : i32, i32
  }
  func.func @transform_3(%arg0: i32) -> (i32, i32) {
    %c0_i32 = arith.constant 0 : i32
    %c0_i32_0 = arith.constant 0 : i32
    %c0_i32_1 = arith.constant 0 : i32
    return %c0_i32, %c0_i32_0 : i32, i32
  }
  func.func @transform_4(%arg0: i32) -> (i32, i32) {
    %c0_i32 = arith.constant 0 : i32
    %c0_i32_0 = arith.constant 0 : i32
    %c0_i32_1 = arith.constant 0 : i32
    return %c0_i32, %c0_i32_0 : i32, i32
  }
  func.func @transform_5(%arg0: i32) -> (i32, i32) {
    %c0_i32 = arith.constant 0 : i32
    %c0_i32_0 = arith.constant 0 : i32
    %c0_i32_1 = arith.constant 0 : i32
    return %c0_i32, %c0_i32_0 : i32, i32
  }
  func.func @transform_6(%arg0: i32) -> (i32, i32) {
    %c0_i32 = arith.constant 0 : i32
    %c0_i32_0 = arith.constant 0 : i32
    %c0_i32_1 = arith.constant 0 : i32
    return %c0_i32, %c0_i32_0 : i32, i32
  }
  func.func @transform_7(%arg0: i32) -> (i32, i32) {
    %c0_i32 = arith.constant 0 : i32
    %c0_i32_0 = arith.constant 0 : i32
    return %c0_i32, %arg0 : i32, i32
  }
}

</mosaic_0001>

<llo_original>
// kernel: tpu_custom_call.1
$region0: #{tpu_custom_call.1}
  #allocation0 [shape = 'u32[]', space=smem, size = 0x4, offset = 0x4, fixed_abs, tag = 'smem constant byte address 0x4 - core index']
  #allocation1 [shape = 'u32[144,128]{1,0:T(1,128)}', space=vmem, size = 0x12000, scoped, tag = 'internal scratch']
  #allocation2 [shape = 'f32[1,1]{1,0:T(1,128)S(1)}', space=vmem, size = 0x200, scoped, tag = 'scoped memory for tpu_custom_call.1']
  %s0 = inlined_call_operand.vmem [shape: f32[32,128], index: 0, kind: input, shape index: {}]
  %s1 = inlined_call_operand.vmem [shape: f32[64,32], index: 1, kind: input, shape index: {}]
  %s2 = inlined_call_operand.vmem [shape: f32[64,1], index: 2, kind: input, shape index: {}]
  %s3 = inlined_call_operand.vmem [shape: f32[16,64], index: 3, kind: input, shape index: {}]
  %s4 = inlined_call_operand.vmem [shape: f32[16,1], index: 4, kind: input, shape index: {}]
  %s5 = inlined_call_operand.vmem [shape: f32[1,16], index: 5, kind: input, shape index: {}]
  %s6 = inlined_call_operand.<no memory space> [shape: f32[1,1], index: 6, kind: input, shape index: {}]
  %s7 = inlined_call_operand.hbm [shape: f32[1,128], index: 7, kind: output, shape index: {}]
  %s8 = sld [smem:[#allocation0]]
  $region38: #{tpu_custom_call.1} parent=0
    _
  %s10 = ssub.s32 1, %s8
  %s11 = scalar_select 0, %s10, %s8
  %v12 = vstv %s6
  %13 = vst [vmem:[#allocation2] sm:$0x1] %v12
  $region1: #{tpu_custom_call.1} parent=0
    #allocation3 [shape = 'u8[512]{0}', space=vmem, size = 0x400, scoped, tag = 'output window, operand 0, single buffered']
    #allocation4 [shape = 's32[1]{0}', space=sflag, size = 0x4, scoped, tag = 'scoped memory for tpu_custom_call.1']
    %14 = vsyncpa [#allocation4], 0
    // Predicated region
    $region2: #{tpu_custom_call.1} parent=1 // pred_check
      _
    $region3: #{tpu_custom_call.1} parent=1 // pred_check_branch
      %16 = sbr.rel (0) target = $region5
    $region4: #{tpu_custom_call.1} parent=1 // pred_region
      _
    $region5: #{tpu_custom_call.1} parent=1 // pred_fallthru
      _
    // Predicated region
    $region6: #{tpu_custom_call.1} parent=1 // pred_check
      _
    $region7: #{tpu_custom_call.1} parent=1 // pred_check_branch
      %18 = sbr.rel (0) target = $region9
    $region8: #{tpu_custom_call.1} parent=1 // pred_region
      _
    $region9: #{tpu_custom_call.1} parent=1 // pred_fallthru
      _
    // Predicated region
    $region10: #{tpu_custom_call.1} parent=1 // pred_check
      _
    $region11: #{tpu_custom_call.1} parent=1 // pred_check_branch
      %20 = sbr.rel (0) target = $region13
    $region12: #{tpu_custom_call.1} parent=1 // pred_region
      _
    $region13: #{tpu_custom_call.1} parent=1 // pred_fallthru
      _
    // Predicated region
    $region14: #{tpu_custom_call.1} parent=1 // pred_check
      _
    $region15: #{tpu_custom_call.1} parent=1 // pred_check_branch
      %22 = sbr.rel (0) target = $region17
    $region16: #{tpu_custom_call.1} parent=1 // pred_region
      _
    $region17: #{tpu_custom_call.1} parent=1 // pred_fallthru
      _
    // Predicated region
    $region18: #{tpu_custom_call.1} parent=1 // pred_check
      _
    $region19: #{tpu_custom_call.1} parent=1 // pred_check_branch
      %24 = sbr.rel (0) target = $region21
    $region20: #{tpu_custom_call.1} parent=1 // pred_region
      _
    $region21: #{tpu_custom_call.1} parent=1 // pred_fallthru
      _
    // Predicated region
    $region22: #{tpu_custom_call.1} parent=1 // pred_check
      _
    $region23: #{tpu_custom_call.1} parent=1 // pred_check_branch
      %26 = sbr.rel (0) target = $region25
    $region24: #{tpu_custom_call.1} parent=1 // pred_region
      _
    $region25: #{tpu_custom_call.1} parent=1 // pred_fallthru
      _
    // Predicated region
    $region26: #{tpu_custom_call.1} parent=1 // pred_check
      _
    $region27: #{tpu_custom_call.1} parent=1 // pred_check_branch
      %28 = sbr.rel (0) target = $region29
    $region28: #{tpu_custom_call.1} parent=1 // pred_region
      _
    $region29: #{tpu_custom_call.1} parent=1 // pred_fallthru
      _
    %v29 = vld [vmem:[%s0] sm:$0xff]
    %v30 = vld [vmem:[%s0 + $0x8] sm:$0xff]
    %v31 = vld [vmem:[%s0 + $0x10] sm:$0xff]
    %v32 = vld [vmem:[%s0 + $0x18] sm:$0xff]
    %v33 = vld [vmem:[%s1] sm:$0xff]
    %v34 = vld [vmem:[%s1 + $0x8] sm:$0xff]
    %v35 = vld [vmem:[%s1 + $0x10] sm:$0xff]
    %v36 = vld [vmem:[%s1 + $0x18] sm:$0xff]
    %v37 = vld [vmem:[%s1 + $0x20] sm:$0xff]
    %v38 = vld [vmem:[%s1 + $0x28] sm:$0xff]
    %v39 = vld [vmem:[%s1 + $0x30] sm:$0xff]
    %v40 = vld [vmem:[%s1 + $0x38] sm:$0xff]
    %v41 = vld [vmem:[%s2] sm:$0xff]
    %v42 = vld [vmem:[%s2 + $0x8] sm:$0xff]
    %v43 = vld [vmem:[%s2 + $0x10] sm:$0xff]
    %v44 = vld [vmem:[%s2 + $0x18] sm:$0xff]
    %v45 = vld [vmem:[%s2 + $0x20] sm:$0xff]
    %v46 = vld [vmem:[%s2 + $0x28] sm:$0xff]
    %v47 = vld [vmem:[%s2 + $0x30] sm:$0xff]
    %v48 = vld [vmem:[%s2 + $0x38] sm:$0xff]
    %50 = vset.pattern.permute.xlu0 0
    %51 = vperm.xlu0 %50, %v41
    %v52 = vpop.permute.xlu0 %51
    %55 = vset.pattern.permute.xlu0 0
    %56 = vperm.xlu0 %55, %v42
    %v57 = vpop.permute.xlu0 %56
    %60 = vset.pattern.permute.xlu0 0
    %61 = vperm.xlu0 %60, %v43
    %v62 = vpop.permute.xlu0 %61
    %65 = vset.pattern.permute.xlu0 0
    %66 = vperm.xlu0 %65, %v44
    %v67 = vpop.permute.xlu0 %66
    %70 = vset.pattern.permute.xlu0 0
    %71 = vperm.xlu0 %70, %v45
    %v72 = vpop.permute.xlu0 %71
    %75 = vset.pattern.permute.xlu0 0
    %76 = vperm.xlu0 %75, %v46
    %v77 = vpop.permute.xlu0 %76
    %80 = vset.pattern.permute.xlu0 0
    %81 = vperm.xlu0 %80, %v47
    %v82 = vpop.permute.xlu0 %81
    %85 = vset.pattern.permute.xlu0 0
    %86 = vperm.xlu0 %85, %v48
    %v87 = vpop.permute.xlu0 %86
    %vm89 = vcmask 261120
    %v91 = vsel %vm89, %v33, 0
    %v94 = vsel %vm89, %v34, 0
    %v97 = vsel %vm89, %v35, 0
    %v100 = vsel %vm89, %v36, 0
    %v103 = vsel %vm89, %v37, 0
    %v106 = vsel %vm89, %v38, 0
    %v109 = vsel %vm89, %v39, 0
    %v112 = vsel %vm89, %v40, 0
    %114 = vmatprep.subr.mxu0 0.0
    %115 = vmatpush1.msra.mxu0 %v29
    %116 = vmatprep.subr.mxu0 0.0
    %117 = vmatpush1.msra.mxu0 %v30
    %118 = vmatprep.subr.mxu0 0.0
    %119 = vmatpush1.msra.mxu0 %v31
    %120 = vmatprep.subr.mxu0 0.0
    %121 = vmatpush1.msra.mxu0 %v32
    %122 = vmatprep.subr.mxu0 0.0
    %123 = vmatpush1.msra.mxu0 0.0
    %124 = vmatprep.subr.mxu0 0.0
    %125 = vmatpush1.msra.mxu0 0.0
    %126 = vmatprep.subr.mxu0 0.0
    %127 = vmatpush1.msra.mxu0 0.0
    %128 = vmatprep.subr.mxu0 0.0
    %129 = vmatpush1.msra.mxu0 0.0
    %130 = vmatprep.subr.mxu0 0.0
    %131 = vmatpush1.msra.mxu0 0.0
    %132 = vmatprep.subr.mxu0 0.0
    %133 = vmatpush1.msra.mxu0 0.0
    %134 = vmatprep.subr.mxu0 0.0
    %135 = vmatpush1.msra.mxu0 0.0
    %136 = vmatprep.subr.mxu0 0.0
    %137 = vmatpush1.msra.mxu0 0.0
    %138 = vmatprep.subr.mxu0 0.0
    %139 = vmatpush1.msra.mxu0 0.0
    %140 = vmatprep.subr.mxu0 0.0
    %141 = vmatpush1.msra.mxu0 0.0
    %142 = vmatprep.subr.mxu0 0.0
    %143 = vmatpush1.msra.mxu0 0.0
    %144 = vmatprep.subr.mxu0 0.0
    %145 = vmatpush1.msra.mxu0 0.0
    %146 = vmatprep.subr.mxu0 0.0
    %147 = vmatpush1.msra.mxu0 0.0
    %148 = vmatprep.subr.mxu0 0.0
    %149 = vmatpush1.msra.mxu0 0.0
    %150 = vmatprep.subr.mxu0 0.0
    %151 = vmatpush1.msra.mxu0 0.0
    %152 = vmatprep.subr.mxu0 0.0
    %153 = vmatpush1.msra.mxu0 0.0
    %154 = vmatprep.subr.mxu0 0.0
    %155 = vmatpush1.msra.mxu0 0.0
    %156 = vmatprep.subr.mxu0 0.0
    %157 = vmatpush1.msra.mxu0 0.0
    %158 = vmatprep.subr.mxu0 0.0
    %159 = vmatpush1.msra.mxu0 0.0
    %160 = vmatprep.subr.mxu0 0.0
    %161 = vmatpush1.msra.mxu0 0.0
    %162 = vmatprep.subr.mxu0 0.0
    %163 = vmatpush1.msra.mxu0 0.0
    %164 = vmatprep.subr.mxu0 0.0
    %165 = vmatpush1.msra.mxu0 0.0
    %166 = vmatprep.subr.mxu0 0.0
    %167 = vmatpush1.msra.mxu0 0.0
    %168 = vmatprep.subr.mxu0 0.0
    %169 = vmatpush1.msra.mxu0 0.0
    %170 = vmatprep.subr.mxu0 0.0
    %171 = vmatpush1.msra.mxu0 0.0
    %172 = vmatprep.subr.mxu0 0.0
    %173 = vmatpush1.msra.mxu0 0.0
    %174 = vmatprep.subr.mxu0 0.0
    %175 = vmatpush1.msra.mxu0 0.0
    %176 = vmatprep.subr.mxu0 0.0
    %177 = vmatpush1.msra.mxu0 0.0
    %178 = vmatprep.mubr.f32.mxu0 0.0
    %179 = vmatmul.mubr.f32.gmra.mrb[0].mxu0 %v91
    %v180 = vpop.f32.mrb[0].mxu0
    %v181 = vadd.f32 %v52, %v180
    %v182 = vpop.f32.mrb[0].mxu0
    %183 = vmatprep.mubr.f32.mxu0 0.0
    %184 = vmatmul.mubr.f32.gmra.mrb[0].mxu0 %v94
    %v185 = vpop.f32.mrb[0].mxu0
    %v186 = vadd.f32 %v57, %v185
    %v187 = vpop.f32.mrb[0].mxu0
    %188 = vmatprep.mubr.f32.mxu0 0.0
    %189 = vmatmul.mubr.f32.gmra.mrb[0].mxu0 %v97
    %v190 = vpop.f32.mrb[0].mxu0
    %v191 = vadd.f32 %v62, %v190
    %v192 = vpop.f32.mrb[0].mxu0
    %193 = vmatprep.mubr.f32.mxu0 0.0
    %194 = vmatmul.mubr.f32.gmra.mrb[0].mxu0 %v100
    %v195 = vpop.f32.mrb[0].mxu0
    %v196 = vadd.f32 %v67, %v195
    %v197 = vpop.f32.mrb[0].mxu0
    %198 = vmatprep.mubr.f32.mxu0 0.0
    %199 = vmatmul.mubr.f32.gmra.mrb[0].mxu0 %v103
    %v200 = vpop.f32.mrb[0].mxu0
    %v201 = vadd.f32 %v72, %v200
    %v202 = vpop.f32.mrb[0].mxu0
    %203 = vmatprep.mubr.f32.mxu0 0.0
    %204 = vmatmul.mubr.f32.gmra.mrb[0].mxu0 %v106
    %v205 = vpop.f32.mrb[0].mxu0
    %v206 = vadd.f32 %v77, %v205
    %v207 = vpop.f32.mrb[0].mxu0
    %208 = vmatprep.mubr.f32.mxu0 0.0
    %209 = vmatmul.mubr.f32.gmra.mrb[0].mxu0 %v109
    %v210 = vpop.f32.mrb[0].mxu0
    %v211 = vadd.f32 %v82, %v210
    %v212 = vpop.f32.mrb[0].mxu0
    %213 = vmatprep.mubr.f32.mxu0 0.0
    %214 = vmatmul.mubr.f32.gmra.mrb[0].mxu0 %v112
    %v215 = vpop.f32.mrb[0].mxu0
    %v216 = vadd.f32 %v87, %v215
    %v217 = vpop.f32.mrb[0].mxu0
    %218 = vdwg.mxu0
    %vm219 = vcmp.gt.f32.partialorder %v181, 0.0
    %vm220 = vcmp.gt.f32.partialorder %v186, 0.0
    %vm221 = vcmp.gt.f32.partialorder %v191, 0.0
    %vm222 = vcmp.gt.f32.partialorder %v196, 0.0
    %vm223 = vcmp.gt.f32.partialorder %v201, 0.0
    %vm224 = vcmp.gt.f32.partialorder %v206, 0.0
    %vm225 = vcmp.gt.f32.partialorder %v211, 0.0
    %vm226 = vcmp.gt.f32.partialorder %v216, 0.0
    %v227 = vmul.f32 %v181, 0.2
    %v228 = vmul.f32 %v186, 0.2
    %v229 = vmul.f32 %v191, 0.2
    %v230 = vmul.f32 %v196, 0.2
    %v231 = vmul.f32 %v201, 0.2
    %v232 = vmul.f32 %v206, 0.2
    %v233 = vmul.f32 %v211, 0.2
    %v234 = vmul.f32 %v216, 0.2
    %v235 = vsel %vm219, %v181, %v227
    %v236 = vsel %vm220, %v186, %v228
    %v237 = vsel %vm221, %v191, %v229
    %v238 = vsel %vm222, %v196, %v230
    %v239 = vsel %vm223, %v201, %v231
    %v240 = vsel %vm224, %v206, %v232
    %v241 = vsel %vm225, %v211, %v233
    %v242 = vsel %vm226, %v216, %v234
    %v243 = vld [vmem:[%s3] sm:$0xff]
    %v244 = vld [vmem:[%s3 + $0x8] sm:$0xff]
    %v245 = vld [vmem:[%s4] sm:$0xff]
    %v246 = vld [vmem:[%s4 + $0x8] sm:$0xff]
    %248 = vset.pattern.permute.xlu0 0
    %249 = vperm.xlu0 %248, %v245
    %v250 = vpop.permute.xlu0 %249
    %253 = vset.pattern.permute.xlu0 0
    %254 = vperm.xlu0 %253, %v246
    %v255 = vpop.permute.xlu0 %254
    %vm257 = vcmask 523264
    %v259 = vsel %vm257, %v243, 0
    %v262 = vsel %vm257, %v244, 0
    %264 = vmatprep.subr.mxu0 0.0
    %265 = vmatpush1.msra.mxu0 %v235
    %266 = vmatprep.subr.mxu0 0.0
    %267 = vmatpush1.msra.mxu0 %v236
    %268 = vmatprep.subr.mxu0 0.0
    %269 = vmatpush1.msra.mxu0 %v237
    %270 = vmatprep.subr.mxu0 0.0
    %271 = vmatpush1.msra.mxu0 %v238
    %272 = vmatprep.subr.mxu0 0.0
    %273 = vmatpush1.msra.mxu0 %v239
    %274 = vmatprep.subr.mxu0 0.0
    %275 = vmatpush1.msra.mxu0 %v240
    %276 = vmatprep.subr.mxu0 0.0
    %277 = vmatpush1.msra.mxu0 %v241
    %278 = vmatprep.subr.mxu0 0.0
    %279 = vmatpush1.msra.mxu0 %v242
    %280 = vmatprep.subr.mxu0 0.0
    %281 = vmatpush1.msra.mxu0 0.0
    %282 = vmatprep.subr.mxu0 0.0
    %283 = vmatpush1.msra.mxu0 0.0
    %284 = vmatprep.subr.mxu0 0.0
    %285 = vmatpush1.msra.mxu0 0.0
    %286 = vmatprep.subr.mxu0 0.0
    %287 = vmatpush1.msra.mxu0 0.0
    %288 = vmatprep.subr.mxu0 0.0
    %289 = vmatpush1.msra.mxu0 0.0
    %290 = vmatprep.subr.mxu0 0.0
    %291 = vmatpush1.msra.mxu0 0.0
    %292 = vmatprep.subr.mxu0 0.0
    %293 = vmatpush1.msra.mxu0 0.0
    %294 = vmatprep.subr.mxu0 0.0
    %295 = vmatpush1.msra.mxu0 0.0
    %296 = vmatprep.subr.mxu0 0.0
    %297 = vmatpush1.msra.mxu0 0.0
    %298 = vmatprep.subr.mxu0 0.0
    %299 = vmatpush1.msra.mxu0 0.0
    %300 = vmatprep.subr.mxu0 0.0
    %301 = vmatpush1.msra.mxu0 0.0
    %302 = vmatprep.subr.mxu0 0.0
    %303 = vmatpush1.msra.mxu0 0.0
    %304 = vmatprep.subr.mxu0 0.0
    %305 = vmatpush1.msra.mxu0 0.0
    %306 = vmatprep.subr.mxu0 0.0
    %307 = vmatpush1.msra.mxu0 0.0
    %308 = vmatprep.subr.mxu0 0.0
    %309 = vmatpush1.msra.mxu0 0.0
    %310 = vmatprep.subr.mxu0 0.0
    %311 = vmatpush1.msra.mxu0 0.0
    %312 = vmatprep.subr.mxu0 0.0
    %313 = vmatpush1.msra.mxu0 0.0
    %314 = vmatprep.subr.mxu0 0.0
    %315 = vmatpush1.msra.mxu0 0.0
    %316 = vmatprep.subr.mxu0 0.0
    %317 = vmatpush1.msra.mxu0 0.0
    %318 = vmatprep.subr.mxu0 0.0
    %319 = vmatpush1.msra.mxu0 0.0
    %320 = vmatprep.subr.mxu0 0.0
    %321 = vmatpush1.msra.mxu0 0.0
    %322 = vmatprep.subr.mxu0 0.0
    %323 = vmatpush1.msra.mxu0 0.0
    %324 = vmatprep.subr.mxu0 0.0
    %325 = vmatpush1.msra.mxu0 0.0
    %326 = vmatprep.subr.mxu0 0.0
    %327 = vmatpush1.msra.mxu0 0.0
    %328 = vmatprep.mubr.f32.mxu0 0.0
    %329 = vmatmul.mubr.f32.gmra.mrb[0].mxu0 %v259
    %v330 = vpop.f32.mrb[0].mxu0
    %v331 = vadd.f32 %v250, %v330
    %v332 = vpop.f32.mrb[0].mxu0
    %333 = vmatprep.mubr.f32.mxu0 0.0
    %334 = vmatmul.mubr.f32.gmra.mrb[0].mxu0 %v262
    %v335 = vpop.f32.mrb[0].mxu0
    %v336 = vadd.f32 %v255, %v335
    %v337 = vpop.f32.mrb[0].mxu0
    %338 = vdwg.mxu0
    %vm339 = vcmp.gt.f32.partialorder %v331, 0.0
    %vm340 = vcmp.gt.f32.partialorder %v336, 0.0
    %v341 = vmul.f32 %v331, 0.2
    %v342 = vmul.f32 %v336, 0.2
    %v343 = vsel %vm339, %v331, %v341
    %v344 = vsel %vm340, %v336, %v342
    %v345 = vld [vmem:[%s5] sm:$0x1]
    %v346 = vld [vmem:[#allocation2] sm:$0x1]
    %348 = vset.pattern.permute.xlu0 0
    %349 = vperm.xlu0 %348, %v346
    %v350 = vpop.permute.xlu0 %349
    %v352 = vlaneseq
    %v353 = vshrl.u32 %v352, 7
    %v354 = vsub.s32 0, %v353
    %v355 = vrot.slane %v350, %v354
    %vm356 = vcmask 130048
    %v358 = vsel %vm356, %v345, 0
    %360 = vmatprep.subr.mxu0 0.0
    %361 = vmatpush1.msra.mxu0 %v343
    %362 = vmatprep.subr.mxu0 0.0
    %363 = vmatpush1.msra.mxu0 %v344
    %364 = vmatprep.subr.mxu0 0.0
    %365 = vmatpush1.msra.mxu0 0.0
    %366 = vmatprep.subr.mxu0 0.0
    %367 = vmatpush1.msra.mxu0 0.0
    %368 = vmatprep.subr.mxu0 0.0
    %369 = vmatpush1.msra.mxu0 0.0
    %370 = vmatprep.subr.mxu0 0.0
    %371 = vmatpush1.msra.mxu0 0.0
    %372 = vmatprep.subr.mxu0 0.0
    %373 = vmatpush1.msra.mxu0 0.0
    %374 = vmatprep.subr.mxu0 0.0
    %375 = vmatpush1.msra.mxu0 0.0
    %376 = vmatprep.subr.mxu0 0.0
    %377 = vmatpush1.msra.mxu0 0.0
    %378 = vmatprep.subr.mxu0 0.0
    %379 = vmatpush1.msra.mxu0 0.0
    %380 = vmatprep.subr.mxu0 0.0
    %381 = vmatpush1.msra.mxu0 0.0
    %382 = vmatprep.subr.mxu0 0.0
    %383 = vmatpush1.msra.mxu0 0.0
    %384 = vmatprep.subr.mxu0 0.0
    %385 = vmatpush1.msra.mxu0 0.0
    %386 = vmatprep.subr.mxu0 0.0
    %387 = vmatpush1.msra.mxu0 0.0
    %388 = vmatprep.subr.mxu0 0.0
    %389 = vmatpush1.msra.mxu0 0.0
    %390 = vmatprep.subr.mxu0 0.0
    %391 = vmatpush1.msra.mxu0 0.0
    %392 = vmatprep.subr.mxu0 0.0
    %393 = vmatpush1.msra.mxu0 0.0
    %394 = vmatprep.subr.mxu0 0.0
    %395 = vmatpush1.msra.mxu0 0.0
    %396 = vmatprep.subr.mxu0 0.0
    %397 = vmatpush1.msra.mxu0 0.0
    %398 = vmatprep.subr.mxu0 0.0
    %399 = vmatpush1.msra.mxu0 0.0
    %400 = vmatprep.subr.mxu0 0.0
    %401 = vmatpush1.msra.mxu0 0.0
    %402 = vmatprep.subr.mxu0 0.0
    %403 = vmatpush1.msra.mxu0 0.0
    %404 = vmatprep.subr.mxu0 0.0
    %405 = vmatpush1.msra.mxu0 0.0
    %406 = vmatprep.subr.mxu0 0.0
    %407 = vmatpush1.msra.mxu0 0.0
    %408 = vmatprep.subr.mxu0 0.0
    %409 = vmatpush1.msra.mxu0 0.0
    %410 = vmatprep.subr.mxu0 0.0
    %411 = vmatpush1.msra.mxu0 0.0
    %412 = vmatprep.subr.mxu0 0.0
    %413 = vmatpush1.msra.mxu0 0.0
    %414 = vmatprep.subr.mxu0 0.0
    %415 = vmatpush1.msra.mxu0 0.0
    %416 = vmatprep.subr.mxu0 0.0
    %417 = vmatpush1.msra.mxu0 0.0
    %418 = vmatprep.subr.mxu0 0.0
    %419 = vmatpush1.msra.mxu0 0.0
    %420 = vmatprep.subr.mxu0 0.0
    %421 = vmatpush1.msra.mxu0 0.0
    %422 = vmatprep.subr.mxu0 0.0
    %423 = vmatpush1.msra.mxu0 0.0
    %424 = vmatprep.mubr.f32.mxu0 0.0
    %425 = vmatmul.mubr.f32.gmra.mrb[0].mxu0 %v358
    %v426 = vpop.f32.mrb[0].mxu0
    %v427 = vadd.f32 %v355, %v426
    %v428 = vpop.f32.mrb[0].mxu0
    %429 = vdwg.mxu0
    %430 = vst [vmem:[#allocation3] sm:$0x1] %v427
    // Predicated region
    $region30: #{tpu_custom_call.1} parent=1 // pred_check
      _
    $region31: #{tpu_custom_call.1} parent=1 // pred_check_branch
      %432 = sbr.rel (0) target = $region33
    $region32: #{tpu_custom_call.1} parent=1 // pred_region
      %s434 = ssub.s32 16, 16
      %435 = vsyncadd [#allocation4], %s434
      %s437 = sshll.u32 [#allocation3], 4
      %s438 = int_to_ptr.vmem [resolvable:$true] %s437
      %440 = dma.vmem_to_hbm [thread:$0]  %s438, 16, %s7, [#allocation4]
    $region33: #{tpu_custom_call.1} parent=1 // pred_fallthru
      _
    // Predicated region
    $region34: #{tpu_custom_call.1} parent=1 // pred_check
      _
    $region35: #{tpu_custom_call.1} parent=1 // pred_check_branch
      %442 = sbr.rel (0) target = $region37
    $region36: #{tpu_custom_call.1} parent=1 // pred_region
      %443 = dma.done [#allocation4], 16
    $region37: #{tpu_custom_call.1} parent=1 // pred_fallthru
      _
    %444 = vsyncpa [#allocation4], 1

</llo_original>
